<compile_context>
chip_gen: v5e
topology: v5e:2x2
jax: 0.10.0
libtpu: 0.0.40
codegen_flags: <defaults>
</compile_context>

<pallas_src>
import jax
import jax.numpy as jnp
from jax.experimental import pallas as pl
from jax.experimental.pallas import tpu as pltpu


def _make_partial_kernel(rows, total_rows):
    """Per-chunk partial sum of input * weight, reduced over rows via MXU."""
    tail = total_rows % rows           # static; 0 => every block is full

    def _dot(w, x, o_ref):
        # (1, rows) @ (rows, D) -> (1, D), f32 accumulation on the MXU.
        o_ref[...] = jax.lax.dot_general(
            w, x,
            dimension_numbers=(((1,), (0,)), ((), ())),
            preferred_element_type=jnp.float32)

    def kernel(x_ref, w_ref, o_ref):
        if tail == 0:
            _dot(w_ref[...], x_ref[...], o_ref)
        else:
            is_tail = pl.program_id(0) == pl.num_programs(0) - 1

            @pl.when(jnp.logical_not(is_tail))
            def _():                              # fast path: no masking
                _dot(w_ref[...], x_ref[...], o_ref)

            @pl.when(is_tail)
            def _():                              # last block only
                # Zero rows past the logical end BEFORE the multiply so any
                # NaN/Inf garbage in the padded region cannot reach the sum.
                # (w is already zero-padded in the wrapper.)
                row = jax.lax.broadcasted_iota(jnp.int32, (rows, 1), 0)
                x = x_ref[...]
                x_m = jnp.where(row < tail, x, jnp.zeros_like(x))
                _dot(w_ref[...], x_m, o_ref)

    return kernel


def reward_criterion_binary(inp, target, reward, depth=None, block_rows=None):
    """inp: (B, L, D) float, target: (B, L) int, reward: (B, L) float.

    `block_rows`, if given and < B*L, must be a multiple of 128.
    """
    B, L, D = inp.shape
    if depth is None:
        depth = D
    T = B * L
    itemsize = jnp.dtype(inp.dtype).itemsize

    # ---- tiny O(B*L) prep in the wrapper (not worth a kernel) -------------
    mask = (target > 0).astype(jnp.float32)
    mask = jnp.concatenate([jnp.ones((B, 1), jnp.float32), mask[:, :-1]],
                           axis=1)                         # shifted mask
    den = jnp.sum(mask)                                    # >= B, never zero
    w = (reward.astype(jnp.float32) * mask).reshape(1, T)  # per-token weight

    # ---- big tensor stays in its native dtype; contiguous reshape only ----
    x = inp.reshape(T, D)

    # ---- tile size: ~8 MiB lane-dense blocks, rows % 128 == 0 -------------
    target_block_bytes = 8 * 1024 * 1024
    if block_rows is None:
        rows = max(128, (target_block_bytes // (D * itemsize)) // 128 * 128)
        if rows >= T:
            if T >= 256 and T * D * itemsize > target_block_bytes:
                # Still a big tensor: split in two so both v7x cores get work.
                rows = (((T + 1) // 2) + 127) // 128 * 128
            else:
                rows = T                                   # single full block
    else:
        rows = min(block_rows, T)
    G = pl.cdiv(T, rows)

    # Lane-dense weights, zero-padded to G*rows, same dtype as x for the MXU.
    w = jnp.pad(w, ((0, 0), (0, G * rows - T))).astype(inp.dtype)

    # ---- right-size VMEM: 2x double-buffered x block + w tile + headroom ---
    x_block_bytes = rows * D * itemsize
    w_block_bytes = rows * 32            # (1, rows) pads sublanes -> 32 B/elem
    vmem_limit = int(2 * x_block_bytes + 2 * w_block_bytes + (4 << 20))
    vmem_limit = max(vmem_limit, 16 << 20)

    cost = pl.CostEstimate(
        flops=2 * T * D,
        bytes_accessed=T * D * itemsize + G * rows * itemsize + G * D * 4,
        transcendentals=0)

    partials = pl.pallas_call(
        _make_partial_kernel(rows, T),
        out_shape=jax.ShapeDtypeStruct((G, D), jnp.float32),
        grid=(G,),
        in_specs=[
            pl.BlockSpec((rows, D), lambda i: (i, 0)),     # streamed input
            pl.BlockSpec((1, rows), lambda i: (0, i)),     # lane-dense weights
        ],
        out_specs=pl.BlockSpec((1, D), lambda i: (i, 0)),  # per-chunk partial
        compiler_params=pltpu.CompilerParams(
            dimension_semantics=("parallel",),             # independent chunks
            vmem_limit_bytes=vmem_limit,
        ),
        cost_estimate=cost,
    )(x, w)

    # ---- finalize: tiny reduction + negate + divide in the wrapper --------
    return -(jnp.sum(partials) / den)


def _reference(inp, target, reward):
    B = target.shape[0]
    mask = (target > 0).astype(jnp.float32)
    mask = jnp.concatenate([jnp.ones((B, 1), jnp.float32), mask[:, :-1]],
                           axis=1)
    out = -inp.astype(jnp.float32) * (reward.astype(jnp.float32) * mask)[:, :, None]
    return jnp.sum(out) / jnp.sum(mask)


if __name__ == "__main__":
    key = jax.random.PRNGKey(0)
    k1, k2, k3, k4, k5, k6 = jax.random.split(key, 6)

    # --- test 1: small demo shape, single full block, f32 MXU path ----------
    B, L, D = 2, 8, 32
    inp = jax.random.normal(k1, (B, L, D), dtype=jnp.float32)
    target = jax.random.randint(k2, (B, L), 0, 5, dtype=jnp.int32)  # has zeros
    reward = jax.random.normal(k3, (B, L), dtype=jnp.float32)

    out = jax.block_until_ready(
        reward_criterion_binary(inp, target, reward, depth=D))
    ref = jax.block_until_ready(_reference(inp, target, reward))
    assert jnp.allclose(out, ref, rtol=1e-4, atol=1e-4), (out, ref)

    # --- test 2: multi-block grid with a partial tail block + bf16 input ----
    B2, L2, D2 = 4, 40, 32          # T = 160, block_rows=128 -> G=2, tail=32
    inp2 = jax.random.normal(k4, (B2, L2, D2), dtype=jnp.bfloat16)
    target2 = jax.random.randint(k5, (B2, L2), 0, 5, dtype=jnp.int32)
    reward2 = jax.random.normal(k6, (B2, L2), dtype=jnp.float32)

    out2 = jax.block_until_ready(
        reward_criterion_binary(inp2, target2, reward2, depth=D2,
                                block_rows=128))
    ref2 = jax.block_until_ready(_reference(inp2, target2, reward2))
    assert jnp.allclose(out2, ref2, rtol=2e-2, atol=2e-2), (out2, ref2)

    print("KERNEL_OK")
</pallas_src>

<mosaic_0001>
module attributes {stable_mosaic.version = 11 : i64} {
  func.func @kernel(%arg0: i32, %arg1: memref<16x32xf32, #tpu.memory_space<vmem>>, %arg2: memref<1x16xf32, #tpu.memory_space<vmem>>, %arg3: memref<1x32xf32, #tpu.memory_space<vmem>>) attributes {dimension_semantics = [#tpu.dimension_semantics<parallel>], iteration_bounds = array<i64: 1>, scalar_prefetch = 0 : i64, scratch_operands = 0 : i64, tpu.core_type = #tpu.core_type<tc>, window_params = [{transform_indices = @transform_0, window_bounds = array<i64: 16, 32>}, {transform_indices = @transform_1, window_bounds = array<i64: 1, 16>}, {transform_indices = @transform_2, window_bounds = array<i64: 1, 32>}]} {
    %c0 = arith.constant 0 : index
    %c0_0 = arith.constant 0 : index
    %0 = vector.load %arg2[%c0, %c0_0] : memref<1x16xf32, #tpu.memory_space<vmem>>, vector<1x16xf32>
    %c0_1 = arith.constant 0 : index
    %c0_2 = arith.constant 0 : index
    %1 = vector.load %arg1[%c0_1, %c0_2] : memref<16x32xf32, #tpu.memory_space<vmem>>, vector<16x32xf32>
    %cst = arith.constant dense<0.000000e+00> : vector<1x32xf32>
    %2 = tpu.matmul %0, %1, %cst {dimension_numbers = #tpu.dot_dimension_numbers<[1], [0], [0], [1], [0, 0, 1, 1], [], []>} : vector<1x16xf32>, vector<16x32xf32>, vector<1x32xf32> -> vector<1x32xf32>
    %c0_3 = arith.constant 0 : index
    %c0_4 = arith.constant 0 : index
    %3 = vector.load %arg3[%c0_3, %c0_4] : memref<1x32xf32, #tpu.memory_space<vmem>>, vector<1x32xf32>
    tpu.vector_store %arg3[%c0_3, %c0_4], %2 {strides = array<i32>} : memref<1x32xf32, #tpu.memory_space<vmem>>, vector<1x32xf32>,
    return
  }
  func.func @transform_0(%arg0: i32) -> (i32, i32) {
    %c0_i32 = arith.constant 0 : i32
    %c0_i32_0 = arith.constant 0 : i32
    return %arg0, %c0_i32 : i32, i32
  }
  func.func @transform_1(%arg0: i32) -> (i32, i32) {
    %c0_i32 = arith.constant 0 : i32
    %c0_i32_0 = arith.constant 0 : i32
    return %c0_i32, %arg0 : i32, i32
  }
  func.func @transform_2(%arg0: i32) -> (i32, i32) {
    %c0_i32 = arith.constant 0 : i32
    %c0_i32_0 = arith.constant 0 : i32
    return %arg0, %c0_i32 : i32, i32
  }
}

</mosaic_0001>

<llo_original>
// kernel: tpu_custom_call.1
$region0: #{tpu_custom_call.1}
  #allocation0 [shape = 'u32[]', space=smem, size = 0x4, offset = 0x4, fixed_abs, tag = 'smem constant byte address 0x4 - core index']
  #allocation1 [shape = 'u32[72,128]{1,0:T(1,128)}', space=vmem, size = 0x9000, scoped, tag = 'internal scratch']
  %s0 = inlined_call_operand.hbm [shape: f32[16,32], index: 0, kind: input, shape index: {}]
  %s1 = inlined_call_operand.hbm [shape: f32[1,16], index: 1, kind: input, shape index: {}]
  %s2 = inlined_call_operand.hbm [shape: f32[1,32], index: 2, kind: output, shape index: {}]
  %s3 = sld [smem:[#allocation0]]
  $region26: #{tpu_custom_call.1} parent=0
    _
  %s5 = ssub.s32 1, %s3
  %s6 = scalar_select 0, %s5, %s3
  $region1: #{tpu_custom_call.1} parent=0
    #allocation2 [shape = 'u8[8192]{0}', space=vmem, size = 0x2000, scoped, tag = 'input window, operand 0, single buffered']
    #allocation3 [shape = 's32[1]{0}', space=sflag, size = 0x4, scoped, tag = 'scoped memory for tpu_custom_call.1']
    #allocation4 [shape = 's32[1]{0}', space=sflag, size = 0x4, scoped, tag = 'scoped memory for tpu_custom_call.1']
    #allocation5 [shape = 'u8[512]{0}', space=vmem, size = 0x400, scoped, tag = 'input window, operand 1, single buffered']
    #allocation6 [shape = 's32[1]{0}', space=sflag, size = 0x4, scoped, tag = 'scoped memory for tpu_custom_call.1']
    #allocation7 [shape = 'u8[512]{0}', space=vmem, size = 0x400, scoped, tag = 'output window, operand 0, single buffered']
    %7 = vsyncpa [#allocation3], 0
    %8 = vsyncpa [#allocation6], 0
    %9 = vsyncpa [#allocation4], 0
    // Predicated region
    $region2: #{tpu_custom_call.1} parent=1 // pred_check
      _
    $region3: #{tpu_custom_call.1} parent=1 // pred_check_branch
      %11 = sbr.rel (0) target = $region5
    $region4: #{tpu_custom_call.1} parent=1 // pred_region
      %13 = vsyncadd [#allocation3], 0
      %s14 = sshll.u32 %s0, 4
      %s15 = int_to_ptr.hbm [resolvable:$true] %s14
      %s16 = sshll.u32 [#allocation2], 4
      %s17 = int_to_ptr.vmem [resolvable:$true] %s16
      %22 = dma.hbm_to_vmem [thread:$0]  %s15, 256, %s17, [#allocation3], 128, 128, 8
    $region5: #{tpu_custom_call.1} parent=1 // pred_fallthru
      _
    // Predicated region
    $region6: #{tpu_custom_call.1} parent=1 // pred_check
      _
    $region7: #{tpu_custom_call.1} parent=1 // pred_check_branch
      %24 = sbr.rel (0) target = $region9
    $region8: #{tpu_custom_call.1} parent=1 // pred_region
      %26 = vsyncadd [#allocation6], 0
      %s28 = sshll.u32 %s1, 4
      %s29 = int_to_ptr.hbm [resolvable:$true] %s28
      %s30 = sshll.u32 [#allocation5], 4
      %s31 = int_to_ptr.vmem [resolvable:$true] %s30
      %33 = dma.hbm_to_vmem [thread:$0]  %s29, 16, %s31, [#allocation6]
    $region9: #{tpu_custom_call.1} parent=1 // pred_fallthru
      _
    // Predicated region
    $region10: #{tpu_custom_call.1} parent=1 // pred_check
      _
    $region11: #{tpu_custom_call.1} parent=1 // pred_check_branch
      %35 = sbr.rel (0) target = $region13
    $region12: #{tpu_custom_call.1} parent=1 // pred_region
      %37 = dma.done [#allocation3], 256
    $region13: #{tpu_custom_call.1} parent=1 // pred_fallthru
      _
    // Predicated region
    $region14: #{tpu_custom_call.1} parent=1 // pred_check
      _
    $region15: #{tpu_custom_call.1} parent=1 // pred_check_branch
      %39 = sbr.rel (0) target = $region17
    $region16: #{tpu_custom_call.1} parent=1 // pred_region
      %41 = dma.done [#allocation6], 16
    $region17: #{tpu_custom_call.1} parent=1 // pred_fallthru
      _
    %v42 = vld [vmem:[#allocation5] sm:$0x1]
    %v43 = vld [vmem:[#allocation2] sm:$0xff]
    %v44 = vld [vmem:[#allocation2 + $0x8] sm:$0xff]
    %vm45 = vcmask 130048
    %v47 = vsel %vm45, %v42, 0
    %49 = vmatpush.msra.mxu0 0.0
    %50 = vmatpush.msra.mxu0 0.0
    %51 = vmatpush.msra.mxu0 0.0
    %52 = vmatpush.msra.mxu0 0.0
    %53 = vmatpush.msra.mxu0 0.0
    %54 = vmatpush.msra.mxu0 0.0
    %55 = vmatpush.msra.mxu0 0.0
    %56 = vmatpush.msra.mxu0 0.0
    %57 = vmatpush.msra.mxu0 0.0
    %58 = vmatpush.msra.mxu0 0.0
    %59 = vmatpush.msra.mxu0 0.0
    %60 = vmatpush.msra.mxu0 0.0
    %61 = vmatpush.msra.mxu0 0.0
    %62 = vmatpush.msra.mxu0 0.0
    %63 = vmatpush.msra.mxu0 %v44
    %64 = vmatpush.msra.mxu0 %v43
    %65 = vmatmul.f32.gmra.mxu0 %v47
    %v66 = vpop.f32.mrf.mxu0
    %v67 = vadd.f32 0.0, %v66
    %68 = vdwg.mxu0
    %vm69 = vcmask 253952
    %70 = vst.msk [vmem:[#allocation7] sm:$0x1] %vm69, %v67
    // Predicated region
    $region18: #{tpu_custom_call.1} parent=1 // pred_check
      _
    $region19: #{tpu_custom_call.1} parent=1 // pred_check_branch
      %72 = sbr.rel (0) target = $region21
    $region20: #{tpu_custom_call.1} parent=1 // pred_region
      %74 = vsyncadd [#allocation4], 0
      %s76 = sshll.u32 [#allocation7], 4
      %s77 = int_to_ptr.vmem [resolvable:$true] %s76
      %s78 = sshll.u32 %s2, 4
      %s79 = int_to_ptr.hbm [resolvable:$true] %s78
      %81 = dma.vmem_to_hbm [thread:$0]  %s77, 16, %s79, [#allocation4]
    $region21: #{tpu_custom_call.1} parent=1 // pred_fallthru
      _
    // Predicated region
    $region22: #{tpu_custom_call.1} parent=1 // pred_check
      _
    $region23: #{tpu_custom_call.1} parent=1 // pred_check_branch
      %83 = sbr.rel (0) target = $region25
    $region24: #{tpu_custom_call.1} parent=1 // pred_region
      %85 = dma.done [#allocation4], 16
    $region25: #{tpu_custom_call.1} parent=1 // pred_fallthru
      _
    %86 = vsyncpa [#allocation3], 1
    %87 = vsyncpa [#allocation6], 1
    %88 = vsyncpa [#allocation4], 1

</llo_original>
